<compile_context>
chip_gen: v6e
topology: v6e:2x2x1
jax: 0.10.0
libtpu: 0.0.40
codegen_flags: <defaults>
</compile_context>

<pallas_src>
import functools

import jax
import jax.numpy as jnp
from jax.experimental import pallas as pl
from jax.experimental.pallas import tpu as pltpu

_NEG_BIG = -1e30  # finite "-inf" sentinel, safe under +Gumbel and max-reductions


def _batch_soft_kernel(dist_ref, unif_ref, pid_row_ref, pid_col_ref, out_ref,
                       *, margin, temperature):
    dist = dist_ref[...].astype(jnp.float32)            # (TB, B)
    neg_big = jnp.float32(_NEG_BIG)

    # mask_pos[i, j] = (pids[i] == pids[j]) — boolean, never converted to f32.
    mask_pos = pid_col_ref[...] == pid_row_ref[...]     # (TB,1) vs (1,B) -> (TB,B)

    # ---- shared Gumbel(0,1) noise ------------------------------------------
    # One array reused by both samplers: exact because positive/negative
    # supports are complementary per row (disjoint Gumbel entries per argmax).
    u = jnp.maximum(unif_ref[...].astype(jnp.float32), jnp.float32(1e-12))
    g = -jnp.log(-jnp.log(u))                           # (TB, B), EUP work

    inv_t = jnp.float32(1.0 / temperature)
    scaled = dist * inv_t                               # computed once

    # softmax(dist/T) sampling over positives == argmax( dist/T + g ) on positives
    # softmin(dist/T) sampling over negatives == argmax( g - dist/T ) on negatives
    score_pos = jnp.where(mask_pos, scaled + g, neg_big)
    score_neg = jnp.where(mask_pos, neg_big, g - scaled)

    max_pos = jnp.max(score_pos, axis=1, keepdims=True)  # (TB, 1)
    max_neg = jnp.max(score_neg, axis=1, keepdims=True)

    # gather-free "value at argmax": select the winning column, reduce over lanes
    positive = jnp.max(jnp.where(score_pos == max_pos, dist, neg_big),
                       axis=1, keepdims=True)            # (TB, 1)
    negative = jnp.max(jnp.where(score_neg == max_neg, dist, neg_big),
                       axis=1, keepdims=True)            # (TB, 1)

    diff = positive - negative

    # _apply_margin (static dispatch on the margin argument)
    if isinstance(margin, (int, float)) and not isinstance(margin, bool):
        result = jnp.maximum(diff + jnp.float32(margin), 0.0)
    elif isinstance(margin, str) and margin.lower() == 'soft':
        result = jax.nn.softplus(diff)
    elif isinstance(margin, str) and margin.lower() == 'none':
        result = diff
    else:
        raise NotImplementedError(
            'The margin %s is not implemented in BatchSoft!' % margin)

    out_ref[...] = result                                # (TB, 1)


def _row_tile(B: int) -> int:
    """Row-block size: multiple of 8 (f32 sublane), bounded so the live
    (TB,B) f32 temporaries stay well under VMEM even on v7x (64 MiB)."""
    if B <= 256:
        return B
    for tb in (256, 128, 64, 32, 16, 8):
        if B % tb == 0:
            return tb
    return B  # irregular B: fall back to a single full-rows block


@functools.partial(jax.jit, static_argnames=("margin", "temperature"))
def batch_soft(dist, pids, key, *, margin=0.2, temperature=1.0):
    """Pallas BatchSoft forward: per-example adaptive-weighted triplet loss."""
    B = dist.shape[0]
    pid_row = pids.astype(jnp.int32).reshape(1, B)
    pid_col = pids.astype(jnp.int32).reshape(B, 1)
    # Single shared uniform noise array (Gumbel transform happens in-kernel).
    unif = jax.random.uniform(key, (B, B), dtype=jnp.float32)

    TB = _row_tile(B)
    grid = (pl.cdiv(B, TB),)

    kernel = functools.partial(_batch_soft_kernel,
                               margin=margin, temperature=temperature)

    out = pl.pallas_call(
        kernel,
        out_shape=jax.ShapeDtypeStruct((B, 1), jnp.float32),
        grid=grid,
        in_specs=[
            pl.BlockSpec((TB, B), lambda i: (i, 0)),   # dist row block
            pl.BlockSpec((TB, B), lambda i: (i, 0)),   # uniform noise row block
            pl.BlockSpec((1, B), lambda i: (0, 0)),    # pids as a row (resident)
            pl.BlockSpec((TB, 1), lambda i: (i, 0)),   # pids as a column block
        ],
        out_specs=pl.BlockSpec((TB, 1), lambda i: (i, 0)),
        compiler_params=pltpu.CompilerParams(
            dimension_semantics=("parallel",)),
    )(dist, unif, pid_row, pid_col)
    return out[:, 0]


def _batch_hard_reference(dist, pids, margin):
    """T -> 0 limit of batch_soft: hardest positive / hardest negative."""
    mask = pids[None, :] == pids[:, None]
    fp = jnp.max(jnp.where(mask, dist, -jnp.inf), axis=1)
    fn = jnp.min(jnp.where(mask, jnp.inf, dist), axis=1)
    return jnp.maximum(fp - fn + margin, 0.0)


if __name__ == "__main__":
    B, D = 8, 32
    MARGIN = 0.2

    key = jax.random.PRNGKey(0)
    k_emb, k_s1, k_s2 = jax.random.split(key, 3)
    emb = jax.random.normal(k_emb, (B, D), dtype=jnp.float32)
    d = emb[:, None, :] - emb[None, :, :]
    dist = jnp.sqrt(jnp.sum(d * d, axis=-1) + 1e-12)        # (B, B) all-to-all
    pids = jnp.array([0, 0, 1, 1, 2, 2, 3, 3], dtype=jnp.int32)

    # --- check 1: T -> 0 makes the softmax sampling deterministic (= batch hard)
    loss_cold = batch_soft(dist, pids, k_s1, margin=MARGIN, temperature=1e-6)
    loss_cold = jax.block_until_ready(loss_cold)
    ref_cold = _batch_hard_reference(dist, pids, MARGIN)
    assert jnp.allclose(loss_cold, ref_cold, atol=1e-4, rtol=1e-4), (loss_cold, ref_cold)

    # --- check 2: T = 1.0 stochastic sampling stays inside valid per-row bounds
    loss = jax.block_until_ready(batch_soft(dist, pids, k_s2, margin=MARGIN,
                                            temperature=1.0))
    mask = pids[None, :] == pids[:, None]
    pos_min = jnp.min(jnp.where(mask, dist, jnp.inf), axis=1)
    pos_max = jnp.max(jnp.where(mask, dist, -jnp.inf), axis=1)
    neg_min = jnp.min(jnp.where(mask, jnp.inf, dist), axis=1)
    neg_max = jnp.max(jnp.where(mask, -jnp.inf, dist), axis=1)
    lo = jnp.maximum(pos_min - neg_max + MARGIN, 0.0)
    hi = jnp.maximum(pos_max - neg_min + MARGIN, 0.0)
    assert jnp.all(jnp.isfinite(loss))
    assert jnp.all(loss >= lo - 1e-4) and jnp.all(loss <= hi + 1e-4), (loss, lo, hi)

    print("KERNEL_OK")
</pallas_src>

<mosaic_0001>
module attributes {stable_mosaic.version = 11 : i64} {
  func.func @_batch_soft_kernel(%arg0: i32, %arg1: memref<8x8xf32, #tpu.memory_space<vmem>>, %arg2: memref<8x8xf32, #tpu.memory_space<vmem>>, %arg3: memref<1x8xi32, #tpu.memory_space<vmem>>, %arg4: memref<8x1xi32, #tpu.memory_space<vmem>>, %arg5: memref<8x1xf32, #tpu.memory_space<vmem>>) attributes {dimension_semantics = [#tpu.dimension_semantics<parallel>], iteration_bounds = array<i64: 1>, scalar_prefetch = 0 : i64, scratch_operands = 0 : i64, tpu.core_type = #tpu.core_type<tc>, window_params = [{transform_indices = @transform_0, window_bounds = array<i64: 8, 8>}, {transform_indices = @transform_1, window_bounds = array<i64: 8, 8>}, {pipeline_mode = #tpu.pipeline_mode<synchronous>, transform_indices = @transform_2, window_bounds = array<i64: 1, 8>}, {transform_indices = @transform_3, window_bounds = array<i64: 8, 1>}, {transform_indices = @transform_4, window_bounds = array<i64: 8, 1>}]} {
    %c0 = arith.constant 0 : index
    %c0_0 = arith.constant 0 : index
    %0 = vector.load %arg1[%c0, %c0_0] : memref<8x8xf32, #tpu.memory_space<vmem>>, vector<8x8xf32>
    %c0_1 = arith.constant 0 : index
    %c0_2 = arith.constant 0 : index
    %1 = vector.load %arg4[%c0_1, %c0_2] : memref<8x1xi32, #tpu.memory_space<vmem>>, vector<8x1xi32>
    %c0_3 = arith.constant 0 : index
    %c0_4 = arith.constant 0 : index
    %2 = vector.load %arg3[%c0_3, %c0_4] : memref<1x8xi32, #tpu.memory_space<vmem>>, vector<1x8xi32>
    %3 = vector.broadcast %1 : vector<8x1xi32> to vector<8x8xi32>
    %4 = vector.broadcast %2 : vector<1x8xi32> to vector<8x8xi32>
    %5 = arith.cmpi eq, %3, %4 : vector<8x8xi32>
    %c0_5 = arith.constant 0 : index
    %c0_6 = arith.constant 0 : index
    %6 = vector.load %arg2[%c0_5, %c0_6] : memref<8x8xf32, #tpu.memory_space<vmem>>, vector<8x8xf32>
    %cst = arith.constant 9.99999996E-13 : f32
    %7 = vector.broadcast %cst : f32 to vector<8x8xf32>
    %8 = arith.maximumf %6, %7 : vector<8x8xf32>
    %9 = math.log %8 : vector<8x8xf32>
    %cst_7 = arith.constant 0.000000e+00 : f32
    %10 = vector.broadcast %cst_7 : f32 to vector<8x8xf32>
    %11 = arith.subf %10, %9 : vector<8x8xf32>
    %12 = math.log %11 : vector<8x8xf32>
    %cst_8 = arith.constant 0.000000e+00 : f32
    %13 = vector.broadcast %cst_8 : f32 to vector<8x8xf32>
    %14 = arith.subf %13, %12 : vector<8x8xf32>
    %cst_9 = arith.constant 1.000000e+06 : f32
    %15 = vector.broadcast %cst_9 : f32 to vector<8x8xf32>
    %16 = arith.mulf %0, %15 : vector<8x8xf32>
    %17 = arith.addf %16, %14 : vector<8x8xf32>
    %cst_10 = arith.constant -1.000000e+30 : f32
    %18 = vector.broadcast %cst_10 : f32 to vector<8x8xf32>
    %19 = arith.select %5, %17, %18 : vector<8x8xi1>, vector<8x8xf32>
    %20 = arith.subf %14, %16 : vector<8x8xf32>
    %cst_11 = arith.constant -1.000000e+30 : f32
    %21 = vector.broadcast %cst_11 : f32 to vector<8x8xf32>
    %22 = arith.select %5, %21, %20 : vector<8x8xi1>, vector<8x8xf32>
    %cst_12 = arith.constant dense<0xFF800000> : vector<8xf32>
    %23 = vector.multi_reduction <maximumf>, %19, %cst_12 [1] : vector<8x8xf32> to vector<8xf32>
    %24 = vector.shape_cast %23 : vector<8xf32> to vector<8x1xf32>
    %cst_13 = arith.constant dense<0xFF800000> : vector<8xf32>
    %25 = vector.multi_reduction <maximumf>, %22, %cst_13 [1] : vector<8x8xf32> to vector<8xf32>
    %26 = vector.shape_cast %25 : vector<8xf32> to vector<8x1xf32>
    %27 = vector.broadcast %24 : vector<8x1xf32> to vector<8x8xf32>
    %28 = arith.cmpf oeq, %19, %27 : vector<8x8xf32>
    %cst_14 = arith.constant -1.000000e+30 : f32
    %29 = vector.broadcast %cst_14 : f32 to vector<8x8xf32>
    %30 = arith.select %28, %0, %29 : vector<8x8xi1>, vector<8x8xf32>
    %cst_15 = arith.constant dense<0xFF800000> : vector<8xf32>
    %31 = vector.multi_reduction <maximumf>, %30, %cst_15 [1] : vector<8x8xf32> to vector<8xf32>
    %32 = vector.shape_cast %31 : vector<8xf32> to vector<8x1xf32>
    %33 = vector.broadcast %26 : vector<8x1xf32> to vector<8x8xf32>
    %34 = arith.cmpf oeq, %22, %33 : vector<8x8xf32>
    %cst_16 = arith.constant -1.000000e+30 : f32
    %35 = vector.broadcast %cst_16 : f32 to vector<8x8xf32>
    %36 = arith.select %34, %0, %35 : vector<8x8xi1>, vector<8x8xf32>
    %cst_17 = arith.constant dense<0xFF800000> : vector<8xf32>
    %37 = vector.multi_reduction <maximumf>, %36, %cst_17 [1] : vector<8x8xf32> to vector<8xf32>
    %38 = vector.shape_cast %37 : vector<8xf32> to vector<8x1xf32>
    %39 = arith.subf %32, %38 : vector<8x1xf32>
    %cst_18 = arith.constant 2.000000e-01 : f32
    %40 = vector.broadcast %cst_18 : f32 to vector<8x1xf32>
    %41 = arith.addf %39, %40 : vector<8x1xf32>
    %cst_19 = arith.constant 0.000000e+00 : f32
    %42 = vector.broadcast %cst_19 : f32 to vector<8x1xf32>
    %43 = arith.maximumf %41, %42 : vector<8x1xf32>
    %c0_20 = arith.constant 0 : index
    %c0_21 = arith.constant 0 : index
    %44 = vector.load %arg5[%c0_20, %c0_21] : memref<8x1xf32, #tpu.memory_space<vmem>>, vector<8x1xf32>
    tpu.vector_store %arg5[%c0_20, %c0_21], %43 {strides = array<i32>} : memref<8x1xf32, #tpu.memory_space<vmem>>, vector<8x1xf32>,
    return
  }
  func.func @transform_0(%arg0: i32) -> (i32, i32) {
    %c0_i32 = arith.constant 0 : i32
    %c0_i32_0 = arith.constant 0 : i32
    return %arg0, %c0_i32 : i32, i32
  }
  func.func @transform_1(%arg0: i32) -> (i32, i32) {
    %c0_i32 = arith.constant 0 : i32
    %c0_i32_0 = arith.constant 0 : i32
    return %arg0, %c0_i32 : i32, i32
  }
  func.func @transform_2(%arg0: i32) -> (i32, i32) {
    %c0_i32 = arith.constant 0 : i32
    %c0_i32_0 = arith.constant 0 : i32
    %c0_i32_1 = arith.constant 0 : i32
    return %c0_i32, %c0_i32_0 : i32, i32
  }
  func.func @transform_3(%arg0: i32) -> (i32, i32) {
    %c0_i32 = arith.constant 0 : i32
    %c0_i32_0 = arith.constant 0 : i32
    return %arg0, %c0_i32 : i32, i32
  }
  func.func @transform_4(%arg0: i32) -> (i32, i32) {
    %c0_i32 = arith.constant 0 : i32
    %c0_i32_0 = arith.constant 0 : i32
    return %arg0, %c0_i32 : i32, i32
  }
}

</mosaic_0001>

<llo_original>
// kernel: batch_soft.1
$region0: #{batch_soft.1}
  #allocation0 [shape = 'u32[]', space=smem, size = 0x4, offset = 0x4, fixed_abs, tag = 'smem constant byte address 0x4 - core index']
  #allocation1 [shape = 'u32[144,128]{1,0:T(1,128)}', space=vmem, size = 0x12000, scoped, tag = 'internal scratch']
  %s0 = inlined_call_operand.vmem [shape: f32[8,8], index: 0, kind: input, shape index: {}]
  %s1 = inlined_call_operand.vmem [shape: f32[8,8], index: 1, kind: input, shape index: {}]
  %s2 = inlined_call_operand.vmem [shape: s32[1,8], index: 2, kind: input, shape index: {}]
  %s3 = inlined_call_operand.vmem [shape: s32[8,1], index: 3, kind: input, shape index: {}]
  %s4 = inlined_call_operand.vmem [shape: f32[8,1], index: 4, kind: output, shape index: {}]
  %s5 = sld [smem:[#allocation0]]
  $region26: #{batch_soft.1} parent=0
    _
  %s7 = ssub.s32 1, %s5
  %s8 = scalar_select 0, %s7, %s5
  // Predicated region
  $region2: #{batch_soft.1} parent=0 // pred_check
    _
  $region3: #{batch_soft.1} parent=0 // pred_check_branch
    %10 = sbr.rel (0) target = $region5
  $region4: #{batch_soft.1} parent=0 // pred_region
    _
  $region5: #{batch_soft.1} parent=0 // pred_fallthru
    _
  // Predicated region
  $region6: #{batch_soft.1} parent=0 // pred_check
    _
  $region7: #{batch_soft.1} parent=0 // pred_check_branch
    %12 = sbr.rel (0) target = $region9
  $region8: #{batch_soft.1} parent=0 // pred_region
    _
  $region9: #{batch_soft.1} parent=0 // pred_fallthru
    _
  // Predicated region
  $region10: #{batch_soft.1} parent=0 // pred_check
    _
  $region11: #{batch_soft.1} parent=0 // pred_check_branch
    %14 = sbr.rel (0) target = $region13
  $region12: #{batch_soft.1} parent=0 // pred_region
    _
  $region13: #{batch_soft.1} parent=0 // pred_fallthru
    _
  // Predicated region
  $region14: #{batch_soft.1} parent=0 // pred_check
    _
  $region15: #{batch_soft.1} parent=0 // pred_check_branch
    %16 = sbr.rel (0) target = $region17
  $region16: #{batch_soft.1} parent=0 // pred_region
    _
  $region17: #{batch_soft.1} parent=0 // pred_fallthru
    _
  %v17 = vld [vmem:[%s0] sm:$0xff]
  %v18 = vld [vmem:[%s3] sm:$0xff]
  %v19 = vld [vmem:[%s2] sm:$0x1]
  %20 = vset.pattern.permute.xlu0 0
  %21 = vperm.xlu0 %20, %v18
  %v22 = vpop.permute.xlu0 %21
  %v23 = vlaneseq
  %v24 = vshrl.u32 %v23, 7
  %v25 = vsub.s32 0, %v24
  %v26 = vrot.slane %v19, %v25
  %vm27 = vcmp.eq.s32.totalorder %v22, %v26
  %v28 = vld [vmem:[%s1] sm:$0xff]
  %v29 = vmax.f32 %v28, 1e-12
  %v30 = vlog2.pop %v29
  %v31 = vmul.f32 %v30, 0.6931472
  %v32 = vsub.f32 0.0, %v31
  %v33 = vlog2.pop %v32
  %v34 = vmul.f32 %v33, 0.6931472
  %v35 = vsub.f32 0.0, %v34
  %v36 = vmul.f32 %v17, 1000000.0
  %v37 = vadd.f32 %v36, %v35
  %v38 = vsel %vm27, %v37, -1e+30
  %v39 = vsub.f32 %v35, %v36
  %v40 = vsel %vm27, -1e+30, %v39
  %vm41 = vcmask 64512
  %v42 = vsel %vm41, %v38, -inf
  %43 = vmax.xlane.f32.xlu0 %v42
  %v44 = vpop.xlane.xlu0 %43
  %v45 = vsel %vm41, %v40, -inf
  %46 = vmax.xlane.f32.xlu0 %v45
  %v47 = vpop.xlane.xlu0 %46
  %vm48 = vcmp.eq.f32.partialorder %v38, %v44
  %v49 = vsel %vm48, %v17, -1e+30
  %v50 = vsel %vm41, %v49, -inf
  %51 = vmax.xlane.f32.xlu0 %v50
  %v52 = vpop.xlane.xlu0 %51
  %vm53 = vcmp.eq.f32.partialorder %v40, %v47
  %v54 = vsel %vm53, %v17, -1e+30
  %v55 = vsel %vm41, %v54, -inf
  %56 = vmax.xlane.f32.xlu0 %v55
  %v57 = vpop.xlane.xlu0 %56
  %v58 = vsub.f32 %v52, %v57
  %v59 = vadd.f32 %v58, 0.2
  %v60 = vmax.f32 %v59, 0.0
  %vm61 = vcmask 7168
  %62 = vst.msk [vmem:[%s4] sm:$0xff] %vm61, %v60
  // Predicated region
  $region18: #{batch_soft.1} parent=0 // pred_check
    _
  $region19: #{batch_soft.1} parent=0 // pred_check_branch
    %64 = sbr.rel (0) target = $region21
  $region20: #{batch_soft.1} parent=0 // pred_region
    _
  $region21: #{batch_soft.1} parent=0 // pred_fallthru
    _
  // Predicated region
  $region22: #{batch_soft.1} parent=0 // pred_check
    _
  $region23: #{batch_soft.1} parent=0 // pred_check_branch
    %66 = sbr.rel (0) target = $region25
  $region24: #{batch_soft.1} parent=0 // pred_region
    _
  $region25: #{batch_soft.1} parent=0 // pred_fallthru
    _

</llo_original>
